<compile_context>
chip_gen: v5e
topology: v5e:2x2
jax: 0.10.0
libtpu: 0.0.40
codegen_flags: <defaults>
</compile_context>

<pallas_src>
import functools

import jax
import jax.numpy as jnp
from jax import lax
from jax.experimental import pallas as pl
from jax.experimental.pallas import tpu as pltpu


def _ce_label_smooth_kernel(
    targets_ref, logits_ref, out_ref, *, epsilon, num_classes, batch, tile_b
):
    # targets_ref: (tile_b, 1) int32 VMEM
    # logits_ref : (tile_b, C) native-dtype VMEM
    # out_ref    : (1, 8, 128) f32 VMEM — this block's partial loss sum
    i = pl.program_id(0)

    x = logits_ref[...].astype(jnp.float32)
    tb, c = x.shape

    # Numerically stable logsumexp along the class axis.
    m = jnp.max(x, axis=-1, keepdims=True)
    lse = jnp.log(jnp.sum(jnp.exp(x - m), axis=-1, keepdims=True)) + m  # (tb, 1)

    # Target logit via iota compare (no one-hot / smoothed tensor materialized).
    class_ids = lax.broadcasted_iota(jnp.int32, (tb, c), 1)
    tgt = targets_ref[...]                                              # (tb, 1)
    x_t = jnp.sum(jnp.where(class_ids == tgt, x, 0.0), axis=-1, keepdims=True)
    sum_x = jnp.sum(x, axis=-1, keepdims=True)

    # Folded smoothed cross-entropy:
    #   loss_row = lse - (1-eps)*x_t - (eps/C)*sum_x
    loss_row = lse - (1.0 - epsilon) * x_t - (epsilon / num_classes) * sum_x

    # Mask padded rows of the (possibly ragged) final tile.
    row_ids = i * tile_b + lax.broadcasted_iota(jnp.int32, (tb, 1), 0)
    loss_row = jnp.where(row_ids < batch, loss_row, 0.0)

    partial = jnp.sum(loss_row)
    # Broadcast the scalar into a lane-dense block; wrapper reads [block, 0, 0].
    out_ref[...] = jnp.full(out_ref.shape, partial, dtype=jnp.float32)


def cross_entropy_label_smooth(logits, targets, epsilon=0.1, tile_b=None):
    """logits: (B, C); targets: (B,) int class indices. Returns scalar loss."""
    B, C = logits.shape
    itemsize = jnp.dtype(logits.dtype).itemsize

    if tile_b is None:
        # ~8 MiB per logits tile (x2 pipeline buffers => ~16 MiB) keeps us well
        # under the default scoped-VMEM limit on v5e/v6e/v7x.
        budget_bytes = 8 * 1024 * 1024
        rows = max(8, (budget_bytes // (C * itemsize)) // 8 * 8)
        b_rounded = ((B + 7) // 8) * 8
        tile_b = int(min(1024, rows, b_rounded))

    b_pad = ((B + tile_b - 1) // tile_b) * tile_b
    num_blocks = b_pad // tile_b

    if b_pad != B:
        # Pad with finite values (zeros); padded rows are masked in-kernel.
        logits = jnp.pad(logits, ((0, b_pad - B), (0, 0)))
        targets = jnp.pad(targets, (0, b_pad - B))
    targets2d = targets.reshape(b_pad, 1).astype(jnp.int32)

    kernel = functools.partial(
        _ce_label_smooth_kernel,
        epsilon=float(epsilon),
        num_classes=C,
        batch=B,
        tile_b=tile_b,
    )

    partials = pl.pallas_call(
        kernel,
        out_shape=jax.ShapeDtypeStruct((num_blocks, 8, 128), jnp.float32),
        grid=(num_blocks,),
        in_specs=[
            pl.BlockSpec((tile_b, 1), lambda i: (i, 0)),   # targets tile
            pl.BlockSpec((tile_b, C), lambda i: (i, 0)),   # logits tile (native dtype)
        ],
        out_specs=pl.BlockSpec((1, 8, 128), lambda i: (i, 0, 0)),
        compiler_params=pltpu.CompilerParams(
            dimension_semantics=("parallel",),
        ),
    )(targets2d, logits)

    # Final reduction + mean over the true batch size in the wrapper.
    return jnp.sum(partials[:, 0, 0]) / B


def _reference(logits, targets, epsilon=0.1):
    B, C = logits.shape
    log_probs = jax.nn.log_softmax(logits.astype(jnp.float32), axis=1)
    onehot = jax.nn.one_hot(targets, C, dtype=jnp.float32)
    smooth = (1.0 - epsilon) * onehot + epsilon / C
    return jnp.sum(jnp.mean(-smooth * log_probs, axis=0))


if __name__ == "__main__":
    # Module __init__ only needs num_classes / epsilon; forward takes
    # logits (batch, num_classes) and integer targets (batch,).
    num_classes = 16
    batch = 8
    epsilon = 0.1

    key = jax.random.PRNGKey(0)
    k_logits, k_tgt = jax.random.split(key)
    logits = jax.random.normal(k_logits, (batch, num_classes), dtype=jnp.float32)
    targets = jax.random.randint(k_tgt, (batch,), 0, num_classes, dtype=jnp.int32)

    loss = cross_entropy_label_smooth(logits, targets, epsilon)
    loss = jax.block_until_ready(loss)

    ref = _reference(logits, targets, epsilon)
    assert jnp.allclose(loss, ref, atol=1e-5, rtol=1e-5), (loss, ref)

    # A second, ragged / multi-block case to exercise the grid + padding mask.
    batch2, classes2 = 37, 256
    k1, k2 = jax.random.split(jax.random.PRNGKey(1))
    logits2 = jax.random.normal(k1, (batch2, classes2), dtype=jnp.float32)
    targets2 = jax.random.randint(k2, (batch2,), 0, classes2, dtype=jnp.int32)
    loss2 = jax.block_until_ready(
        cross_entropy_label_smooth(logits2, targets2, epsilon, tile_b=16)
    )
    ref2 = _reference(logits2, targets2, epsilon)
    assert jnp.allclose(loss2, ref2, atol=1e-5, rtol=1e-5), (loss2, ref2)

    print("KERNEL_OK")
</pallas_src>

<mosaic_0001>
module attributes {stable_mosaic.version = 11 : i64} {
  func.func @_ce_label_smooth_kernel(%arg0: i32, %arg1: memref<8x1xi32, #tpu.memory_space<vmem>>, %arg2: memref<8x16xf32, #tpu.memory_space<vmem>>, %arg3: memref<1x8x128xf32, #tpu.memory_space<vmem>>) attributes {dimension_semantics = [#tpu.dimension_semantics<parallel>], iteration_bounds = array<i64: 1>, scalar_prefetch = 0 : i64, scratch_operands = 0 : i64, tpu.core_type = #tpu.core_type<tc>, window_params = [{transform_indices = @transform_0, window_bounds = array<i64: 8, 1>}, {transform_indices = @transform_1, window_bounds = array<i64: 8, 16>}, {transform_indices = @transform_2, window_bounds = array<i64: 1, 8, 128>}]} {
    %c0 = arith.constant 0 : index
    %c0_0 = arith.constant 0 : index
    %0 = vector.load %arg2[%c0, %c0_0] : memref<8x16xf32, #tpu.memory_space<vmem>>, vector<8x16xf32>
    %cst = arith.constant dense<0xFF800000> : vector<8xf32>
    %1 = vector.multi_reduction <maximumf>, %0, %cst [1] : vector<8x16xf32> to vector<8xf32>
    %2 = vector.shape_cast %1 : vector<8xf32> to vector<8x1xf32>
    %3 = vector.broadcast %2 : vector<8x1xf32> to vector<8x16xf32>
    %4 = arith.subf %0, %3 : vector<8x16xf32>
    %5 = math.exp %4 : vector<8x16xf32>
    %cst_1 = arith.constant dense<0.000000e+00> : vector<8xf32>
    %6 = vector.multi_reduction <add>, %5, %cst_1 [1] : vector<8x16xf32> to vector<8xf32>
    %7 = vector.shape_cast %6 : vector<8xf32> to vector<8x1xf32>
    %8 = math.log %7 : vector<8x1xf32>
    %9 = arith.addf %8, %2 : vector<8x1xf32>
    %10 = tpu.iota {dimensions = array<i32: 1>} : vector<8x16xi32>
    %c0_2 = arith.constant 0 : index
    %c0_3 = arith.constant 0 : index
    %11 = vector.load %arg1[%c0_2, %c0_3] : memref<8x1xi32, #tpu.memory_space<vmem>>, vector<8x1xi32>
    %12 = vector.broadcast %11 : vector<8x1xi32> to vector<8x16xi32>
    %13 = arith.cmpi eq, %10, %12 : vector<8x16xi32>
    %cst_4 = arith.constant 0.000000e+00 : f32
    %14 = vector.broadcast %cst_4 : f32 to vector<8x16xf32>
    %15 = arith.select %13, %0, %14 : vector<8x16xi1>, vector<8x16xf32>
    %cst_5 = arith.constant dense<0.000000e+00> : vector<8xf32>
    %16 = vector.multi_reduction <add>, %15, %cst_5 [1] : vector<8x16xf32> to vector<8xf32>
    %17 = vector.shape_cast %16 : vector<8xf32> to vector<8x1xf32>
    %cst_6 = arith.constant dense<0.000000e+00> : vector<8xf32>
    %18 = vector.multi_reduction <add>, %0, %cst_6 [1] : vector<8x16xf32> to vector<8xf32>
    %19 = vector.shape_cast %18 : vector<8xf32> to vector<8x1xf32>
    %cst_7 = arith.constant 0.899999976 : f32
    %20 = vector.broadcast %cst_7 : f32 to vector<8x1xf32>
    %21 = arith.mulf %20, %17 : vector<8x1xf32>
    %22 = arith.subf %9, %21 : vector<8x1xf32>
    %cst_8 = arith.constant 6.250000e-03 : f32
    %23 = vector.broadcast %cst_8 : f32 to vector<8x1xf32>
    %24 = arith.mulf %23, %19 : vector<8x1xf32>
    %25 = arith.subf %22, %24 : vector<8x1xf32>
    %c8_i32 = arith.constant 8 : i32
    %26 = arith.muli %arg0, %c8_i32 : i32
    %27 = tpu.iota {dimensions = array<i32: 0>} : vector<8x1xi32>
    %28 = vector.broadcast %26 : i32 to vector<8x1xi32>
    %29 = arith.addi %28, %27 : vector<8x1xi32>
    %c8_i32_9 = arith.constant 8 : i32
    %30 = vector.broadcast %c8_i32_9 : i32 to vector<8x1xi32>
    %31 = arith.cmpi slt, %29, %30 : vector<8x1xi32>
    %cst_10 = arith.constant 0.000000e+00 : f32
    %32 = vector.broadcast %cst_10 : f32 to vector<8x1xf32>
    %33 = arith.select %31, %25, %32 : vector<8x1xi1>, vector<8x1xf32>
    %34 = vector.shape_cast %33 : vector<8x1xf32> to vector<1x8x1xf32>
    %cst_11 = arith.constant dense<0.000000e+00> : vector<1xf32>
    %35 = vector.multi_reduction <add>, %34, %cst_11 [1, 2] : vector<1x8x1xf32> to vector<1xf32>
    %36 = vector.shape_cast %35 : vector<1xf32> to vector<1x1x1xf32>
    %37 = vector.extract %36[0, 0, 0] : f32 from vector<1x1x1xf32>
    %38 = vector.broadcast %37 : f32 to vector<1x8x128xf32>
    %c0_12 = arith.constant 0 : index
    %c0_13 = arith.constant 0 : index
    %c0_14 = arith.constant 0 : index
    %39 = vector.load %arg3[%c0_12, %c0_13, %c0_14] : memref<1x8x128xf32, #tpu.memory_space<vmem>>, vector<1x8x128xf32>
    tpu.vector_store %arg3[%c0_12, %c0_13, %c0_14], %38 {strides = array<i32>} : memref<1x8x128xf32, #tpu.memory_space<vmem>>, vector<1x8x128xf32>,
    return
  }
  func.func @transform_0(%arg0: i32) -> (i32, i32) {
    %c0_i32 = arith.constant 0 : i32
    %c0_i32_0 = arith.constant 0 : i32
    return %arg0, %c0_i32 : i32, i32
  }
  func.func @transform_1(%arg0: i32) -> (i32, i32) {
    %c0_i32 = arith.constant 0 : i32
    %c0_i32_0 = arith.constant 0 : i32
    return %arg0, %c0_i32 : i32, i32
  }
  func.func @transform_2(%arg0: i32) -> (i32, i32, i32) {
    %c0_i32 = arith.constant 0 : i32
    %c0_i32_0 = arith.constant 0 : i32
    %c0_i32_1 = arith.constant 0 : i32
    return %arg0, %c0_i32, %c0_i32_0 : i32, i32, i32
  }
}

</mosaic_0001>

<llo_original>
// kernel: tpu_custom_call.1
$region0: #{tpu_custom_call.1}
  #allocation0 [shape = 'u32[]', space=smem, size = 0x4, offset = 0x4, fixed_abs, tag = 'smem constant byte address 0x4 - core index']
  #allocation1 [shape = 'u32[72,128]{1,0:T(1,128)}', space=vmem, size = 0x9000, scoped, tag = 'internal scratch']
  %s0 = inlined_call_operand.vmem [shape: s32[8,1], index: 0, kind: input, shape index: {}]
  %s1 = inlined_call_operand.vmem [shape: f32[8,16], index: 1, kind: input, shape index: {}]
  %s2 = inlined_call_operand.hbm [shape: f32[1,8,128], index: 2, kind: output, shape index: {}]
  %s3 = sld [smem:[#allocation0]]
  $region18: #{tpu_custom_call.1} parent=0
    _
  %s5 = ssub.s32 1, %s3
  %s6 = scalar_select 0, %s5, %s3
  $region1: #{tpu_custom_call.1} parent=0
    #allocation2 [shape = 'u8[4096]{0}', space=vmem, size = 0x1000, scoped, tag = 'output window, operand 0, single buffered']
    #allocation3 [shape = 's32[1]{0}', space=sflag, size = 0x4, scoped, tag = 'scoped memory for tpu_custom_call.1']
    %7 = vsyncpa [#allocation3], 0
    // Predicated region
    $region2: #{tpu_custom_call.1} parent=1 // pred_check
      _
    $region3: #{tpu_custom_call.1} parent=1 // pred_check_branch
      %9 = sbr.rel (0) target = $region5
    $region4: #{tpu_custom_call.1} parent=1 // pred_region
      _
    $region5: #{tpu_custom_call.1} parent=1 // pred_fallthru
      _
    // Predicated region
    $region6: #{tpu_custom_call.1} parent=1 // pred_check
      _
    $region7: #{tpu_custom_call.1} parent=1 // pred_check_branch
      %11 = sbr.rel (0) target = $region9
    $region8: #{tpu_custom_call.1} parent=1 // pred_region
      _
    $region9: #{tpu_custom_call.1} parent=1 // pred_fallthru
      _
    %v12 = vld [vmem:[%s1] sm:$0xff]
    %vm13 = vcmask 130048
    %v14 = vsel %vm13, %v12, -inf
    %15 = vmax.xlane.f32.xlu0 %v14
    %v16 = vpop.xlane.xlu0 %15
    %v17 = vsub.f32 %v12, %v16
    %v18 = vmul.f32 %v17, 1.442695
    %v19 = vpow.pop %v18
    %v20 = vsel %vm13, %v19, 0.0
    %21 = vadd.xlane.f32.xlu0 %v20
    %v22 = vpop.xlane.xlu0 %21
    %v23 = vlog2.pop %v22
    %v24 = vmul.f32 %v23, 0.6931472
    %v25 = vadd.f32 %v24, %v16
    %v26 = vlaneseq
    %v27 = vand.u32 %v26, 127
    %v28 = vld [vmem:[%s0] sm:$0xff]
    %29 = vset.pattern.permute.xlu0 0
    %30 = vperm.xlu0 %29, %v28
    %v31 = vpop.permute.xlu0 %30
    %vm32 = vcmp.eq.s32.totalorder %v27, %v31
    %v33 = vsel %vm32, %v12, 0.0
    %v34 = vsel %vm13, %v33, 0.0
    %35 = vadd.xlane.f32.xlu0 %v34
    %v36 = vpop.xlane.xlu0 %35
    %v37 = vsel %vm13, %v12, 0.0
    %38 = vadd.xlane.f32.xlu0 %v37
    %v39 = vpop.xlane.xlu0 %38
    %v40 = vmul.f32 %v36, 0.9
    %v41 = vsub.f32 %v25, %v40
    %v42 = vmul.f32 %v39, 0.00625
    %v43 = vsub.f32 %v41, %v42
    %s44 = smul.u32 0, 8
    %v45 = vlaneseq
    %v46 = vshrl.u32 %v45, 7
    %v47 = vstv %s44
    %v48 = vadd.s32 %v47, %v46
    %vm49 = vcmp.lt.s32.totalorder %v48, 8
    %v50 = vsel %vm49, %v43, 0.0
    %vm51 = vcmask 7168
    %v52 = vsel %vm51, %v50, 0.0
    %53 = vadd.xlane.f32.xlu0 %v52
    %v54 = vpop.xlane.xlu0 %53
    %v55 = vrot.slane %v54, 4
    %v56 = vadd.f32 %v54, %v55
    %v57 = vrot.slane %v56, 2
    %v58 = vadd.f32 %v56, %v57
    %v59 = vrot.slane %v58, 1
    %v60 = vadd.f32 %v58, %v59
    %s61 = vtos %v60
    %v62 = vstv %s61
    %63 = vst [vmem:[#allocation2] sm:$0xff] %v62
    // Predicated region
    $region10: #{tpu_custom_call.1} parent=1 // pred_check
      _
    $region11: #{tpu_custom_call.1} parent=1 // pred_check_branch
      %65 = sbr.rel (0) target = $region13
    $region12: #{tpu_custom_call.1} parent=1 // pred_region
      %67 = vsyncadd [#allocation3], 0
      %s69 = sshll.u32 [#allocation2], 4
      %s70 = int_to_ptr.vmem [resolvable:$true] %s69
      %s71 = sshll.u32 %s2, 4
      %s72 = int_to_ptr.hbm [resolvable:$true] %s71
      %74 = dma.vmem_to_hbm [thread:$0]  %s70, 128, %s72, [#allocation3]
    $region13: #{tpu_custom_call.1} parent=1 // pred_fallthru
      _
    // Predicated region
    $region14: #{tpu_custom_call.1} parent=1 // pred_check
      _
    $region15: #{tpu_custom_call.1} parent=1 // pred_check_branch
      %76 = sbr.rel (0) target = $region17
    $region16: #{tpu_custom_call.1} parent=1 // pred_region
      %78 = dma.done [#allocation3], 128
    $region17: #{tpu_custom_call.1} parent=1 // pred_fallthru
      _
    %79 = vsyncpa [#allocation3], 1

</llo_original>
